<compile_context>
chip_gen: v5e
topology: v5e:2x2
jax: 0.10.0
libtpu: 0.0.40
codegen_flags: <defaults>
</compile_context>

<pallas_src>
from functools import partial

import jax
import jax.numpy as jnp
import numpy as np
from jax.experimental import pallas as pl
from jax.experimental.pallas import tpu as pltpu


# ----------------------------------------------------------------------------
# Tiling helpers
# ----------------------------------------------------------------------------
def _round_up(x, m):
    return ((x + m - 1) // m) * m


def _pick_tile(dim, cap, align):
    """Largest tile (multiple of `align`, <= ~cap) covering `dim` in the fewest
    grid steps.  Returns (tile, padded_dim)."""
    d = _round_up(dim, align)
    cap = max(cap, align)
    if d <= cap:
        return d, d
    n_tiles = -(-d // cap)
    tile = _round_up(-(-d // n_tiles), align)
    return tile, tile * n_tiles


_VMEM_LIMIT = 48 * 1024 * 1024   # fits v7x's 64 MiB physical VMEM with headroom


# ----------------------------------------------------------------------------
# Kernel 1: fused document encoder
#   enc = doc + relu(doc @ W_res),   doc = sum_k bow[:, k-tile] @ E[k-tile, :]
# Output tile is VMEM-resident across the vocab (K) grid axis and doubles as
# the f32 accumulator; the residual block runs as the last-K-step epilogue.
# ----------------------------------------------------------------------------
def _encoder_kernel(x_ref, e_ref, wres_ref, o_ref):
    k = pl.program_id(1)

    @pl.when(k == 0)
    def _():
        o_ref[...] = jnp.zeros_like(o_ref)

    o_ref[...] += jnp.dot(x_ref[...], e_ref[...],
                          preferred_element_type=jnp.float32)

    @pl.when(k == pl.num_programs(1) - 1)
    def _():
        doc = o_ref[...]
        res = jnp.dot(doc.astype(wres_ref.dtype), wres_ref[...],
                      preferred_element_type=jnp.float32)
        o_ref[...] = doc + jnp.maximum(res, 0.0)


def fused_encoder(bow, E, W_res, *, tm_cap=256, tk_cap=2048,
                  vmem_limit_bytes=_VMEM_LIMIT):
    """enc[M, D] = doc + relu(doc @ W_res), doc = bow[M, V] @ E[V, D]."""
    M, V = bow.shape
    Ve, D = E.shape
    assert V == Ve and W_res.shape == (D, D), (bow.shape, E.shape, W_res.shape)

    tm, Mp = _pick_tile(M, tm_cap, 16)     # 16-aligned: clean bf16 sublane packing
    tk, Vp = _pick_tile(V, tk_cap, 128)
    Dp = _round_up(D, 128)

    xb = bow.astype(jnp.bfloat16)
    Eb = E.astype(jnp.bfloat16)
    Wb = W_res.astype(jnp.bfloat16)
    if (Mp, Vp) != (M, V):
        xb = jnp.pad(xb, ((0, Mp - M), (0, Vp - V)))
    if (Vp, Dp) != (V, D):
        Eb = jnp.pad(Eb, ((0, Vp - V), (0, Dp - D)))
    if Dp != D:
        Wb = jnp.pad(Wb, ((0, Dp - D), (0, Dp - D)))

    out = pl.pallas_call(
        _encoder_kernel,
        out_shape=jax.ShapeDtypeStruct((Mp, Dp), jnp.float32),
        grid_spec=pltpu.PrefetchScalarGridSpec(
            num_scalar_prefetch=0,
            grid=(Mp // tm, Vp // tk),
            in_specs=[
                pl.BlockSpec((tm, tk), lambda i, k: (i, k)),
                pl.BlockSpec((tk, Dp), lambda i, k: (k, 0)),
                pl.BlockSpec((Dp, Dp), lambda i, k: (0, 0)),   # resident, DMA'd once
            ],
            out_specs=pl.BlockSpec((tm, Dp), lambda i, k: (i, 0)),
        ),
        compiler_params=pltpu.CompilerParams(
            dimension_semantics=("parallel", "arbitrary"),
            vmem_limit_bytes=vmem_limit_bytes,
        ),
    )(xb, Eb, Wb)

    if (Mp, Dp) != (M, D):
        out = out[:M, :D]
    return out


# ----------------------------------------------------------------------------
# Kernel 2: per-label classifier
#   scores = enc @ W_clf + bias   (optionally followed by logsigmoid)
# ----------------------------------------------------------------------------
def _make_classifier_kernel(single_k, apply_logsigmoid):
    def epilogue(z, b_ref):
        z = z + b_ref[...]
        if apply_logsigmoid:
            # stable logsigmoid(z) = min(z, 0) - log1p(exp(-|z|))   (EUP ops)
            z = jnp.minimum(z, 0.0) - jnp.log1p(jnp.exp(-jnp.abs(z)))
        return z

    if single_k:
        # D fits one K tile: no accumulator init/add, single lane-dense store.
        def kernel(x_ref, w_ref, b_ref, o_ref):
            z = jnp.dot(x_ref[...], w_ref[...],
                        preferred_element_type=jnp.float32)
            o_ref[...] = epilogue(z, b_ref)
        return kernel

    def kernel(x_ref, w_ref, b_ref, o_ref):
        k = pl.program_id(2)

        @pl.when(k == 0)
        def _():
            o_ref[...] = jnp.zeros_like(o_ref)

        o_ref[...] += jnp.dot(x_ref[...], w_ref[...],
                              preferred_element_type=jnp.float32)

        @pl.when(k == pl.num_programs(2) - 1)
        def _():
            o_ref[...] = epilogue(o_ref[...], b_ref)

    return kernel


def pallas_classifier(x, w, bias, *, logsigmoid=False, tm_cap=256,
                      tn_cap=2048, tk_cap=2048,
                      vmem_limit_bytes=_VMEM_LIMIT):
    """out[M, N] = x[M, K] @ w[K, N] + bias[1, N] (+ logsigmoid)."""
    M, K = x.shape
    Kw, N = w.shape
    assert K == Kw, (K, Kw)

    tm, Mp = _pick_tile(M, tm_cap, 16)
    tn, Np = _pick_tile(N, tn_cap, 128)
    tk, Kp = _pick_tile(K, tk_cap, 128)

    xb = x.astype(jnp.bfloat16)
    wb = w.astype(jnp.bfloat16)
    b = bias.reshape(1, N).astype(jnp.float32)
    if (Mp, Kp) != (M, K):
        xb = jnp.pad(xb, ((0, Mp - M), (0, Kp - K)))
    if (Kp, Np) != (K, N):
        wb = jnp.pad(wb, ((0, Kp - K), (0, Np - N)))
    if Np != N:
        b = jnp.pad(b, ((0, 0), (0, Np - N)))

    single_k = (Kp // tk) == 1
    kernel = _make_classifier_kernel(single_k, logsigmoid)

    if single_k:
        grid = (Mp // tm, Np // tn)
        in_specs = [
            pl.BlockSpec((tm, Kp), lambda i, j: (i, 0)),
            pl.BlockSpec((Kp, tn), lambda i, j: (0, j)),
            pl.BlockSpec((1, tn), lambda i, j: (0, j)),
        ]
        out_specs = pl.BlockSpec((tm, tn), lambda i, j: (i, j))
        dims = ("parallel", "parallel")
    else:
        grid = (Mp // tm, Np // tn, Kp // tk)
        in_specs = [
            pl.BlockSpec((tm, tk), lambda i, j, k: (i, k)),
            pl.BlockSpec((tk, tn), lambda i, j, k: (k, j)),
            pl.BlockSpec((1, tn), lambda i, j, k: (0, j)),
        ]
        out_specs = pl.BlockSpec((tm, tn), lambda i, j, k: (i, j))
        dims = ("parallel", "parallel", "arbitrary")

    out = pl.pallas_call(
        kernel,
        out_shape=jax.ShapeDtypeStruct((Mp, Np), jnp.float32),
        grid_spec=pltpu.PrefetchScalarGridSpec(
            num_scalar_prefetch=0,
            grid=grid,
            in_specs=in_specs,
            out_specs=out_specs,
        ),
        compiler_params=pltpu.CompilerParams(
            dimension_semantics=dims,
            vmem_limit_bytes=vmem_limit_bytes,
        ),
    )(xb, wb, b)

    if (Mp, Np) != (M, N):
        out = out[:M, :N]
    return out


# ----------------------------------------------------------------------------
# DECAFLBase-equivalent forward path (jitted end-to-end)
# ----------------------------------------------------------------------------
@partial(jax.jit, static_argnames=("logsigmoid",))
def _decaf_forward(bow, E, W_res, W_clf, b_clf, logsigmoid=False):
    enc = fused_encoder(bow, E, W_res)                             # [B, D]
    return pallas_classifier(enc, W_clf, b_clf, logsigmoid=logsigmoid)  # [B, L]


class DECAFLBasePallas:
    """JAX/Pallas re-implementation of DECAFLBase's forward path.

    depth_node := embedding-bag doc encoder + residual block + label classifier
    forward(batch)  -> raw label scores       (DECAFLBase.forward / scores)
    _predict(batch) -> logsigmoid(scores)     (DECAFLBase._predict)
    """

    def __init__(self, emb_weights, res_weights, clf_weights, clf_bias):
        # weights held in bf16 (matmuls are HBM-bandwidth bound); f32 accumulate.
        self.E = jnp.asarray(emb_weights, jnp.bfloat16)        # [V, D]
        self.W_res = jnp.asarray(res_weights, jnp.bfloat16)    # [D, D]
        self.W_clf = jnp.asarray(clf_weights, jnp.bfloat16)    # [D, L]
        self.b_clf = jnp.asarray(clf_bias, jnp.float32).reshape(1, -1)  # [1, L]

    def scores(self, batch, depth=0):
        return _decaf_forward(batch, self.E, self.W_res, self.W_clf, self.b_clf,
                              logsigmoid=False)

    def forward(self, batch, depth=None):
        return self.scores(batch, depth=depth)

    def _predict(self, batch):
        return _decaf_forward(batch, self.E, self.W_res, self.W_clf, self.b_clf,
                              logsigmoid=True)


# ----------------------------------------------------------------------------
# Pure-JAX reference (same bf16-weight / f32-accumulate numerics)
# ----------------------------------------------------------------------------
def _ref_forward(bow, E, W_res, W_clf, b_clf, *, logsigmoid=False):
    bf, f32 = jnp.bfloat16, jnp.float32
    doc = jnp.dot(bow.astype(bf), E.astype(bf), preferred_element_type=f32)
    res = jnp.dot(doc.astype(bf), W_res.astype(bf), preferred_element_type=f32)
    enc = doc + jnp.maximum(res, 0.0)
    out = jnp.dot(enc.astype(bf), W_clf.astype(bf), preferred_element_type=f32)
    out = out + b_clf
    if logsigmoid:
        out = jax.nn.log_sigmoid(out)
    return out


if __name__ == "__main__":
    key = jax.random.PRNGKey(0)
    B, V, D, L = 8, 512, 128, 256   # batch, vocab, hidden, num_labels
    k1, k2, k3, k4, k5 = jax.random.split(key, 5)

    # deterministic synthetic "bag-of-words" documents (L1-normalized)
    bow = (jax.random.uniform(k1, (B, V)) < 0.05).astype(jnp.float32)
    bow = bow / jnp.maximum(bow.sum(-1, keepdims=True), 1.0)

    # deterministic parameter init (shapes implied by the DECAF leaf layer)
    E = jax.random.normal(k2, (V, D), jnp.float32) * 0.05
    W_res = jax.random.normal(k3, (D, D), jnp.float32) * 0.05
    W_clf = jax.random.normal(k4, (D, L), jnp.float32) * 0.05
    b_clf = jax.random.normal(k5, (1, L), jnp.float32) * 0.01

    model = DECAFLBasePallas(E, W_res, W_clf, b_clf)

    scores = model.forward(bow)            # DECAFLBase.forward
    preds = model._predict(bow)            # DECAFLBase._predict (logsigmoid)
    jax.block_until_ready((scores, preds))

    # verify against plain-JAX reference with identical bf16/f32 numerics
    ref_scores = _ref_forward(bow, E, W_res, W_clf, b_clf, logsigmoid=False)
    ref_preds = _ref_forward(bow, E, W_res, W_clf, b_clf, logsigmoid=True)
    assert scores.shape == (B, L) and preds.shape == (B, L)
    np.testing.assert_allclose(np.asarray(scores), np.asarray(ref_scores),
                               rtol=1e-3, atol=1e-3)
    np.testing.assert_allclose(np.asarray(preds), np.asarray(ref_preds),
                               rtol=1e-3, atol=1e-3)

    print("KERNEL_OK")
</pallas_src>

<mosaic_0001>
module attributes {stable_mosaic.version = 11 : i64} {
  func.func @_encoder_kernel(%arg0: i32, %arg1: i32, %arg2: memref<16x512xbf16, #tpu.memory_space<vmem>>, %arg3: memref<512x128xbf16, #tpu.memory_space<vmem>>, %arg4: memref<128x128xbf16, #tpu.memory_space<vmem>>, %arg5: memref<16x128xf32, #tpu.memory_space<vmem>>) attributes {dimension_semantics = [#tpu.dimension_semantics<parallel>, #tpu.dimension_semantics<arbitrary>], iteration_bounds = array<i64: 1, 1>, scalar_prefetch = 0 : i64, scratch_operands = 0 : i64, tpu.core_type = #tpu.core_type<tc>, window_params = [{transform_indices = @transform_0, window_bounds = array<i64: 16, 512>}, {transform_indices = @transform_1, window_bounds = array<i64: 512, 128>}, {pipeline_mode = #tpu.pipeline_mode<synchronous>, transform_indices = @transform_2, window_bounds = array<i64: 128, 128>}, {transform_indices = @transform_3, window_bounds = array<i64: 16, 128>}]} {
    %c0_i32 = arith.constant 0 : i32
    %0 = arith.cmpi eq, %arg1, %c0_i32 : i32
    %1 = arith.extui %0 : i1 to i32
    %c0_i32_0 = arith.constant 0 : i32
    %2 = arith.cmpi ne, %1, %c0_i32_0 : i32
    scf.if %2 {
      %cst_10 = arith.constant 0.000000e+00 : f32
      %12 = vector.broadcast %cst_10 : f32 to vector<16x128xf32>
      %c0_11 = arith.constant 0 : index
      %c0_12 = arith.constant 0 : index
      %13 = vector.load %arg5[%c0_11, %c0_12] : memref<16x128xf32, #tpu.memory_space<vmem>>, vector<16x128xf32>
      tpu.vector_store %arg5[%c0_11, %c0_12], %12 {strides = array<i32>} : memref<16x128xf32, #tpu.memory_space<vmem>>, vector<16x128xf32>,
    } else {
    }
    %c0 = arith.constant 0 : index
    %c0_1 = arith.constant 0 : index
    %3 = vector.load %arg5[%c0, %c0_1] : memref<16x128xf32, #tpu.memory_space<vmem>>, vector<16x128xf32>
    %c0_2 = arith.constant 0 : index
    %c0_3 = arith.constant 0 : index
    %4 = vector.load %arg2[%c0_2, %c0_3] : memref<16x512xbf16, #tpu.memory_space<vmem>>, vector<16x512xbf16>
    %c0_4 = arith.constant 0 : index
    %c0_5 = arith.constant 0 : index
    %5 = vector.load %arg3[%c0_4, %c0_5] : memref<512x128xbf16, #tpu.memory_space<vmem>>, vector<512x128xbf16>
    %cst = arith.constant dense<0.000000e+00> : vector<16x128xf32>
    %6 = tpu.matmul %4, %5, %cst {dimension_numbers = #tpu.dot_dimension_numbers<[1], [0], [0], [1], [0, 0, 1, 1], [], []>} : vector<16x512xbf16>, vector<512x128xbf16>, vector<16x128xf32> -> vector<16x128xf32>
    %7 = arith.addf %3, %6 : vector<16x128xf32>
    %c0_6 = arith.constant 0 : index
    %c0_7 = arith.constant 0 : index
    %8 = vector.load %arg5[%c0_6, %c0_7] : memref<16x128xf32, #tpu.memory_space<vmem>>, vector<16x128xf32>
    tpu.vector_store %arg5[%c0_6, %c0_7], %7 {strides = array<i32>} : memref<16x128xf32, #tpu.memory_space<vmem>>, vector<16x128xf32>,
    %c0_i32_8 = arith.constant 0 : i32
    %9 = arith.cmpi eq, %arg1, %c0_i32_8 : i32
    %10 = arith.extui %9 : i1 to i32
    %c0_i32_9 = arith.constant 0 : i32
    %11 = arith.cmpi ne, %10, %c0_i32_9 : i32
    scf.if %11 {
      %c0_10 = arith.constant 0 : index
      %c0_11 = arith.constant 0 : index
      %12 = vector.load %arg5[%c0_10, %c0_11] : memref<16x128xf32, #tpu.memory_space<vmem>>, vector<16x128xf32>
      %13 = arith.truncf %12 : vector<16x128xf32> to vector<16x128xbf16>
      %c0_12 = arith.constant 0 : index
      %c0_13 = arith.constant 0 : index
      %14 = vector.load %arg4[%c0_12, %c0_13] : memref<128x128xbf16, #tpu.memory_space<vmem>>, vector<128x128xbf16>
      %cst_14 = arith.constant dense<0.000000e+00> : vector<16x128xf32>
      %15 = tpu.matmul %13, %14, %cst_14 {dimension_numbers = #tpu.dot_dimension_numbers<[1], [0], [0], [1], [0, 0, 1, 1], [], []>} : vector<16x128xbf16>, vector<128x128xbf16>, vector<16x128xf32> -> vector<16x128xf32>
      %cst_15 = arith.constant 0.000000e+00 : f32
      %16 = vector.broadcast %cst_15 : f32 to vector<16x128xf32>
      %17 = arith.maximumf %15, %16 : vector<16x128xf32>
      %18 = arith.addf %12, %17 : vector<16x128xf32>
      %c0_16 = arith.constant 0 : index
      %c0_17 = arith.constant 0 : index
      %19 = vector.load %arg5[%c0_16, %c0_17] : memref<16x128xf32, #tpu.memory_space<vmem>>, vector<16x128xf32>
      tpu.vector_store %arg5[%c0_16, %c0_17], %18 {strides = array<i32>} : memref<16x128xf32, #tpu.memory_space<vmem>>, vector<16x128xf32>,
    } else {
    }
    return
  }
  func.func @transform_0(%arg0: i32, %arg1: i32) -> (i32, i32) {
    %c0_i32 = arith.constant 0 : i32
    return %arg0, %arg1 : i32, i32
  }
  func.func @transform_1(%arg0: i32, %arg1: i32) -> (i32, i32) {
    %c0_i32 = arith.constant 0 : i32
    %c0_i32_0 = arith.constant 0 : i32
    return %arg1, %c0_i32 : i32, i32
  }
  func.func @transform_2(%arg0: i32, %arg1: i32) -> (i32, i32) {
    %c0_i32 = arith.constant 0 : i32
    %c0_i32_0 = arith.constant 0 : i32
    %c0_i32_1 = arith.constant 0 : i32
    return %c0_i32, %c0_i32_0 : i32, i32
  }
  func.func @transform_3(%arg0: i32, %arg1: i32) -> (i32, i32) {
    %c0_i32 = arith.constant 0 : i32
    %c0_i32_0 = arith.constant 0 : i32
    return %arg0, %c0_i32 : i32, i32
  }
}

module attributes {stable_mosaic.version = 11 : i64} {
  func.func @kernel(%arg0: i32, %arg1: i32, %arg2: memref<16x128xbf16, #tpu.memory_space<vmem>>, %arg3: memref<128x256xbf16, #tpu.memory_space<vmem>>, %arg4: memref<1x256xf32, #tpu.memory_space<vmem>>, %arg5: memref<16x256xf32, #tpu.memory_space<vmem>>) attributes {dimension_semantics = [#tpu.dimension_semantics<parallel>, #tpu.dimension_semantics<parallel>], iteration_bounds = array<i64: 1, 1>, scalar_prefetch = 0 : i64, scratch_operands = 0 : i64, tpu.core_type = #tpu.core_type<tc>, window_params = [{transform_indices = @transform_0, window_bounds = array<i64: 16, 128>}, {transform_indices = @transform_1, window_bounds = array<i64: 128, 256>}, {transform_indices = @transform_2, window_bounds = array<i64: 1, 256>}, {transform_indices = @transform_3, window_bounds = array<i64: 16, 256>}]} {
    %c0 = arith.constant 0 : index
    %c0_0 = arith.constant 0 : index
    %0 = vector.load %arg2[%c0, %c0_0] : memref<16x128xbf16, #tpu.memory_space<vmem>>, vector<16x128xbf16>
    %c0_1 = arith.constant 0 : index
    %c0_2 = arith.constant 0 : index
    %1 = vector.load %arg3[%c0_1, %c0_2] : memref<128x256xbf16, #tpu.memory_space<vmem>>, vector<128x256xbf16>
    %cst = arith.constant dense<0.000000e+00> : vector<16x256xf32>
    %2 = tpu.matmul %0, %1, %cst {dimension_numbers = #tpu.dot_dimension_numbers<[1], [0], [0], [1], [0, 0, 1, 1], [], []>} : vector<16x128xbf16>, vector<128x256xbf16>, vector<16x256xf32> -> vector<16x256xf32>
    %c0_3 = arith.constant 0 : index
    %c0_4 = arith.constant 0 : index
    %3 = vector.load %arg4[%c0_3, %c0_4] : memref<1x256xf32, #tpu.memory_space<vmem>>, vector<1x256xf32>
    %4 = vector.broadcast %3 : vector<1x256xf32> to vector<16x256xf32>
    %5 = arith.addf %2, %4 : vector<16x256xf32>
    %c0_5 = arith.constant 0 : index
    %c0_6 = arith.constant 0 : index
    %6 = vector.load %arg5[%c0_5, %c0_6] : memref<16x256xf32, #tpu.memory_space<vmem>>, vector<16x256xf32>
    tpu.vector_store %arg5[%c0_5, %c0_6], %5 {strides = array<i32>} : memref<16x256xf32, #tpu.memory_space<vmem>>, vector<16x256xf32>,
    return
  }
  func.func @transform_0(%arg0: i32, %arg1: i32) -> (i32, i32) {
    %c0_i32 = arith.constant 0 : i32
    %c0_i32_0 = arith.constant 0 : i32
    return %arg0, %c0_i32 : i32, i32
  }
  func.func @transform_1(%arg0: i32, %arg1: i32) -> (i32, i32) {
    %c0_i32 = arith.constant 0 : i32
    %c0_i32_0 = arith.constant 0 : i32
    return %c0_i32, %arg1 : i32, i32
  }
  func.func @transform_2(%arg0: i32, %arg1: i32) -> (i32, i32) {
    %c0_i32 = arith.constant 0 : i32
    %c0_i32_0 = arith.constant 0 : i32
    return %c0_i32, %arg1 : i32, i32
  }
  func.func @transform_3(%arg0: i32, %arg1: i32) -> (i32, i32) {
    %c0_i32 = arith.constant 0 : i32
    return %arg0, %arg1 : i32, i32
  }
}

</mosaic_0001>

<llo_original>
// kernel: _decaf_forward.3
$region0: #{_decaf_forward.3}
  #allocation0 [shape = 'u32[]', space=smem, size = 0x4, offset = 0x4, fixed_abs, tag = 'smem constant byte address 0x4 - core index']
  #allocation1 [shape = 'u32[72,128]{1,0:T(1,128)}', space=vmem, size = 0x9000, scoped, tag = 'internal scratch']
  %s0 = inlined_call_operand.vmem [shape: bf16[16,128], index: 0, kind: input, shape index: {}]
  %s1 = inlined_call_operand.hbm [shape: bf16[128,256], index: 1, kind: input, shape index: {}]
  %s2 = inlined_call_operand.vmem [shape: f32[1,256], index: 2, kind: input, shape index: {}]
  %s3 = inlined_call_operand.vmem [shape: f32[16,256], index: 3, kind: output, shape index: {}]
  %s4 = sld [smem:[#allocation0]]
  $region26: #{_decaf_forward.3} parent=0
    _
  %s6 = ssub.s32 1, %s4
  %s7 = scalar_select 0, %s6, %s4
  $region1: #{_decaf_forward.3} parent=0
    #allocation2 [shape = 'u8[65536]{0}', space=vmem, size = 0x10000, scoped, tag = 'input window, operand 1, single buffered']
    #allocation3 [shape = 's32[1]{0}', space=sflag, size = 0x4, scoped, tag = 'scoped memory for _decaf_forward.3']
    %8 = vsyncpa [#allocation3], 0
    // Predicated region
    $region2: #{_decaf_forward.3} parent=1 // pred_check
      _
    $region3: #{_decaf_forward.3} parent=1 // pred_check_branch
      %10 = sbr.rel (0) target = $region5
    $region4: #{_decaf_forward.3} parent=1 // pred_region
      _
    $region5: #{_decaf_forward.3} parent=1 // pred_fallthru
      _
    // Predicated region
    $region6: #{_decaf_forward.3} parent=1 // pred_check
      _
    $region7: #{_decaf_forward.3} parent=1 // pred_check_branch
      %12 = sbr.rel (0) target = $region9
    $region8: #{_decaf_forward.3} parent=1 // pred_region
      %14 = vsyncadd [#allocation3], 0
      %s15 = sshll.u32 %s1, 4
      %s16 = int_to_ptr.hbm [resolvable:$true] %s15
      %s17 = sshll.u32 [#allocation2], 4
      %s18 = int_to_ptr.vmem [resolvable:$true] %s17
      %23 = dma.hbm_to_vmem [thread:$0]  %s16, 2048, %s18, [#allocation3], 128, 128, 8
    $region9: #{_decaf_forward.3} parent=1 // pred_fallthru
      _
    // Predicated region
    $region10: #{_decaf_forward.3} parent=1 // pred_check
      _
    $region11: #{_decaf_forward.3} parent=1 // pred_check_branch
      %25 = sbr.rel (0) target = $region13
    $region12: #{_decaf_forward.3} parent=1 // pred_region
      _
    $region13: #{_decaf_forward.3} parent=1 // pred_fallthru
      _
    // Predicated region
    $region14: #{_decaf_forward.3} parent=1 // pred_check
      _
    $region15: #{_decaf_forward.3} parent=1 // pred_check_branch
      %27 = sbr.rel (0) target = $region17
    $region16: #{_decaf_forward.3} parent=1 // pred_region
      %29 = dma.done [#allocation3], 2048
    $region17: #{_decaf_forward.3} parent=1 // pred_fallthru
      _
    %v30 = vld [vmem:[%s0] sm:$0xf]
    %v31 = vld [vmem:[%s0 + $0x4] sm:$0xf]
    %v32 = vld [vmem:[#allocation2] sm:$0xff]
    %v33 = vld [vmem:[#allocation2 + $0x8] sm:$0xff]
    %v34 = vld [vmem:[#allocation2 + $0x10] sm:$0xff]
    %v35 = vld [vmem:[#allocation2 + $0x18] sm:$0xff]
    %v36 = vld [vmem:[#allocation2 + $0x20] sm:$0xff]
    %v37 = vld [vmem:[#allocation2 + $0x28] sm:$0xff]
    %v38 = vld [vmem:[#allocation2 + $0x30] sm:$0xff]
    %v39 = vld [vmem:[#allocation2 + $0x38] sm:$0xff]
    %v40 = vld [vmem:[#allocation2 + $0x40] sm:$0xff]
    %v41 = vld [vmem:[#allocation2 + $0x48] sm:$0xff]
    %v42 = vld [vmem:[#allocation2 + $0x50] sm:$0xff]
    %v43 = vld [vmem:[#allocation2 + $0x58] sm:$0xff]
    %v44 = vld [vmem:[#allocation2 + $0x60] sm:$0xff]
    %v45 = vld [vmem:[#allocation2 + $0x68] sm:$0xff]
    %v46 = vld [vmem:[#allocation2 + $0x70] sm:$0xff]
    %v47 = vld [vmem:[#allocation2 + $0x78] sm:$0xff]
    %v48 = vld [vmem:[%s2] sm:$0x3]
    %v50 = vperm.slane %v48, 0
    %v51 = vperm.slane %v48, 1
    %v56 = vunpack.c.l.b16 %v30
    %v57 = vunpack.c.l.b16 %v31
    %v58 = vpack.c.b16 %v57, %v56
    %v76 = vunpack.c.l.b16 %v32
    %v77 = vunpack.c.h.b16 %v32
    %v78 = vunpack.c.l.b16 %v33
    %v79 = vunpack.c.h.b16 %v33
    %v80 = vunpack.c.l.b16 %v34
    %v81 = vunpack.c.h.b16 %v34
    %v82 = vunpack.c.l.b16 %v35
    %v83 = vunpack.c.h.b16 %v35
    %v84 = vunpack.c.l.b16 %v36
    %v85 = vunpack.c.h.b16 %v36
    %v86 = vunpack.c.l.b16 %v37
    %v87 = vunpack.c.h.b16 %v37
    %v88 = vunpack.c.l.b16 %v38
    %v89 = vunpack.c.h.b16 %v38
    %v90 = vunpack.c.l.b16 %v39
    %v91 = vunpack.c.h.b16 %v39
    %v92 = vunpack.c.l.b16 %v40
    %v93 = vunpack.c.h.b16 %v40
    %v94 = vunpack.c.l.b16 %v41
    %v95 = vunpack.c.h.b16 %v41
    %v96 = vunpack.c.l.b16 %v42
    %v97 = vunpack.c.h.b16 %v42
    %v98 = vunpack.c.l.b16 %v43
    %v99 = vunpack.c.h.b16 %v43
    %v100 = vunpack.c.l.b16 %v44
    %v101 = vunpack.c.h.b16 %v44
    %v102 = vunpack.c.l.b16 %v45
    %v103 = vunpack.c.h.b16 %v45
    %v104 = vunpack.c.l.b16 %v46
    %v105 = vunpack.c.h.b16 %v46
    %v106 = vunpack.c.l.b16 %v47
    %v107 = vunpack.c.h.b16 %v47
    %v108 = vpack.c.b16 %v78, %v76
    %v109 = vpack.c.b16 %v79, %v77
    %v110 = vpack.c.b16 %v82, %v80
    %v111 = vpack.c.b16 %v83, %v81
    %v112 = vpack.c.b16 %v86, %v84
    %v113 = vpack.c.b16 %v87, %v85
    %v114 = vpack.c.b16 %v90, %v88
    %v115 = vpack.c.b16 %v91, %v89
    %v116 = vpack.c.b16 %v94, %v92
    %v117 = vpack.c.b16 %v95, %v93
    %v118 = vpack.c.b16 %v98, %v96
    %v119 = vpack.c.b16 %v99, %v97
    %v120 = vpack.c.b16 %v102, %v100
    %v121 = vpack.c.b16 %v103, %v101
    %v122 = vpack.c.b16 %v106, %v104
    %v123 = vpack.c.b16 %v107, %v105
    %140 = vmatpush.bf16.msra.mxu0 %v122
    %141 = vmatpush.bf16.msra.mxu0 %v120
    %142 = vmatpush.bf16.msra.mxu0 %v118
    %143 = vmatpush.bf16.msra.mxu0 %v116
    %144 = vmatpush.bf16.msra.mxu0 %v114
    %145 = vmatpush.bf16.msra.mxu0 %v112
    %146 = vmatpush.bf16.msra.mxu0 %v110
    %147 = vmatpush.bf16.msra.mxu0 %v108
    %148 = vmatmul.bf16.gmra.mxu0 %v58
    %v149 = vpop.f32.mrf.mxu0
    %v150 = vadd.f32 %v50, %v149
    %v151 = vpop.f32.mrf.mxu0
    %v152 = vadd.f32 %v50, %v151
    %153 = vdwg.mxu0
    %154 = vmatpush.bf16.msra.mxu0 %v123
    %155 = vmatpush.bf16.msra.mxu0 %v121
    %156 = vmatpush.bf16.msra.mxu0 %v119
    %157 = vmatpush.bf16.msra.mxu0 %v117
    %158 = vmatpush.bf16.msra.mxu0 %v115
    %159 = vmatpush.bf16.msra.mxu0 %v113
    %160 = vmatpush.bf16.msra.mxu0 %v111
    %161 = vmatpush.bf16.msra.mxu0 %v109
    %162 = vmatmul.bf16.gmra.mxu0 %v58
    %v163 = vpop.f32.mrf.mxu0
    %v164 = vadd.f32 %v51, %v163
    %v165 = vpop.f32.mrf.mxu0
    %v166 = vadd.f32 %v51, %v165
    %167 = vdwg.mxu0
    %168 = vst [vmem:[%s3] sm:$0xff] %v150
    %169 = vst [vmem:[%s3 + $0x8] sm:$0xff] %v164
    %170 = vst [vmem:[%s3 + $0x10] sm:$0xff] %v152
    %171 = vst [vmem:[%s3 + $0x18] sm:$0xff] %v166
    // Predicated region
    $region18: #{_decaf_forward.3} parent=1 // pred_check
      _
    $region19: #{_decaf_forward.3} parent=1 // pred_check_branch
      %173 = sbr.rel (0) target = $region21
    $region20: #{_decaf_forward.3} parent=1 // pred_region
      _
    $region21: #{_decaf_forward.3} parent=1 // pred_fallthru
      _
    // Predicated region
    $region22: #{_decaf_forward.3} parent=1 // pred_check
      _
    $region23: #{_decaf_forward.3} parent=1 // pred_check_branch
      %175 = sbr.rel (0) target = $region25
    $region24: #{_decaf_forward.3} parent=1 // pred_region
      _
    $region25: #{_decaf_forward.3} parent=1 // pred_fallthru
      _
    %176 = vsyncpa [#allocation3], 1

// kernel: _decaf_forward.2
$region0: #{_decaf_forward.2}
  #allocation0 [shape = 'u32[]', space=smem, size = 0x4, offset = 0x4, fixed_abs, tag = 'smem constant byte address 0x4 - core index']
  #allocation1 [shape = 'u32[72,128]{1,0:T(1,128)}', space=vmem, size = 0x9000, scoped, tag = 'internal scratch']
  %s0 = inlined_call_operand.vmem [shape: bf16[16,512], index: 0, kind: input, shape index: {}]
  %s1 = inlined_call_operand.hbm [shape: bf16[512,128], index: 1, kind: input, shape index: {}]
  %s2 = inlined_call_operand.vmem [shape: bf16[128,128], index: 2, kind: input, shape index: {}]
  %s3 = inlined_call_operand.vmem [shape: f32[16,128], index: 3, kind: output, shape index: {}]
  %s4 = sld [smem:[#allocation0]]
  $region34: #{_decaf_forward.2} parent=0
    _
  %s6 = ssub.s32 1, %s4
  %s7 = scalar_select 0, %s6, %s4
  $region1: #{_decaf_forward.2} parent=0
    #allocation2 [shape = 'u8[131072]{0}', space=vmem, size = 0x20000, scoped, tag = 'input window, operand 1, single buffered']
    #allocation3 [shape = 's32[1]{0}', space=sflag, size = 0x4, scoped, tag = 'scoped memory for _decaf_forward.2']
    %8 = vsyncpa [#allocation3], 0
    // Predicated region
    $region2: #{_decaf_forward.2} parent=1 // pred_check
      _
    $region3: #{_decaf_forward.2} parent=1 // pred_check_branch
      %10 = sbr.rel (0) target = $region5
    $region4: #{_decaf_forward.2} parent=1 // pred_region
      _
    $region5: #{_decaf_forward.2} parent=1 // pred_fallthru
      _
    // Predicated region
    $region6: #{_decaf_forward.2} parent=1 // pred_check
      _
    $region7: #{_decaf_forward.2} parent=1 // pred_check_branch
      %12 = sbr.rel (0) target = $region9
    $region8: #{_decaf_forward.2} parent=1 // pred_region
      %14 = vsyncadd [#allocation3], 0
      %s15 = sshll.u32 %s1, 4
      %s16 = int_to_ptr.hbm [resolvable:$true] %s15
      %s17 = sshll.u32 [#allocation2], 4
      %s18 = int_to_ptr.vmem [resolvable:$true] %s17
      %23 = dma.hbm_to_vmem [thread:$0]  %s16, 4096, %s18, [#allocation3], 64, 64, 4
    $region9: #{_decaf_forward.2} parent=1 // pred_fallthru
      _
    // Predicated region
    $region10: #{_decaf_forward.2} parent=1 // pred_check
      _
    $region11: #{_decaf_forward.2} parent=1 // pred_check_branch
      %25 = sbr.rel (0) target = $region13
    $region12: #{_decaf_forward.2} parent=1 // pred_region
      _
    $region13: #{_decaf_forward.2} parent=1 // pred_fallthru
      _
    // Predicated region
    $region14: #{_decaf_forward.2} parent=1 // pred_check
      _
    $region15: #{_decaf_forward.2} parent=1 // pred_check_branch
      %27 = sbr.rel (0) target = $region17
    $region16: #{_decaf_forward.2} parent=1 // pred_region
      %29 = dma.done [#allocation3], 4096
    $region17: #{_decaf_forward.2} parent=1 // pred_fallthru
      _
    %p30 = scmp.eq.s32.totalorder 0, 0
    // Predicated region
    $region18: #{_decaf_forward.2} parent=1 // pred_check
      %p31 = pneg %p30
    $region19: #{_decaf_forward.2} parent=1 // pred_check_branch
      %33 = sbr.rel (%p31) target = $region21
    $region20: #{_decaf_forward.2} parent=1 // pred_region
      %34 = vst [vmem:[%s3] sm:$0xff] 0.0
      %35 = vst [vmem:[%s3 + $0x8] sm:$0xff] 0.0
    $region21: #{_decaf_forward.2} parent=1 // pred_fallthru
      _
    %v36 = vld [vmem:[%s3] sm:$0xff]
    %v37 = vld [vmem:[%s3 + $0x8] sm:$0xff]
    %v38 = vld [vmem:[%s0] sm:$0xff]
    %v39 = vld [vmem:[%s0 + $0x8] sm:$0xff]
    %v40 = vld [vmem:[%s0 + $0x10] sm:$0xff]
    %v41 = vld [vmem:[%s0 + $0x18] sm:$0xff]
    %v42 = vld [vmem:[#allocation2] sm:$0xf]
    %v43 = vld [vmem:[#allocation2 + $0x4] sm:$0xf]
    %v44 = vld [vmem:[#allocation2 + $0x8] sm:$0xf]
    %v45 = vld [vmem:[#allocation2 + $0xc] sm:$0xf]
    %v46 = vld [vmem:[#allocation2 + $0x10] sm:$0xf]
    %v47 = vld [vmem:[#allocation2 + $0x14] sm:$0xf]
    %v48 = vld [vmem:[#allocation2 + $0x18] sm:$0xf]
    %v49 = vld [vmem:[#allocation2 + $0x1c] sm:$0xf]
    %v50 = vld [vmem:[#allocation2 + $0x20] sm:$0xf]
    %v51 = vld [vmem:[#allocation2 + $0x24] sm:$0xf]
    %v52 = vld [vmem:[#allocation2 + $0x28] sm:$0xf]
    %v53 = vld [vmem:[#allocation2 + $0x2c] sm:$0xf]
    %v54 = vld [vmem:[#allocation2 + $0x30] sm:$0xf]
    %v55 = vld [vmem:[#allocation2 + $0x34] sm:$0xf]
    %v56 = vld [vmem:[#allocation2 + $0x38] sm:$0xf]
    %v57 = vld [vmem:[#allocation2 + $0x3c] sm:$0xf]
    %v58 = vld [vmem:[#allocation2 + $0x40] sm:$0xf]
    %v59 = vld [vmem:[#allocation2 + $0x44] sm:$0xf]
    %v60 = vld [vmem:[#allocation2 + $0x48] sm:$0xf]
    %v61 = vld [vmem:[#allocation2 + $0x4c] sm:$0xf]
    %v62 = vld [vmem:[#allocation2 + $0x50] sm:$0xf]
    %v63 = vld [vmem:[#allocation2 + $0x54] sm:$0xf]
    %v64 = vld [vmem:[#allocation2 + $0x58] sm:$0xf]
    %v65 = vld [vmem:[#allocation2 + $0x5c] sm:$0xf]
    %v66 = vld [vmem:[#allocation2 + $0x60] sm:$0xf]
    %v67 = vld [vmem:[#allocation2 + $0x64] sm:$0xf]
    %v68 = vld [vmem:[#allocation2 + $0x68] sm:$0xf]
    %v69 = vld [vmem:[#allocation2 + $0x6c] sm:$0xf]
    %v70 = vld [vmem:[#allocation2 + $0x70] sm:$0xf]
    %v71 = vld [vmem:[#allocation2 + $0x74] sm:$0xf]
    %v72 = vld [vmem:[#allocation2 + $0x78] sm:$0xf]
    %v73 = vld [vmem:[#allocation2 + $0x7c] sm:$0xf]
    %v74 = vld [vmem:[#allocation2 + $0x80] sm:$0xf]
    %v75 = vld [vmem:[#allocation2 + $0x84] sm:$0xf]
    %v76 = vld [vmem:[#allocation2 + $0x88] sm:$0xf]
    %v77 = vld [vmem:[#allocation2 + $0x8c] sm:$0xf]
    %v78 = vld [vmem:[#allocation2 + $0x90] sm:$0xf]
    %v79 = vld [vmem:[#allocation2 + $0x94] sm:$0xf]
    %v80 = vld [vmem:[#allocation2 + $0x98] sm:$0xf]
    %v81 = vld [vmem:[#allocation2 + $0x9c] sm:$0xf]
    %v82 = vld [vmem:[#allocation2 + $0xa0] sm:$0xf]
    %v83 = vld [vmem:[#allocation2 + $0xa4] sm:$0xf]
    %v84 = vld [vmem:[#allocation2 + $0xa8] sm:$0xf]
    %v85 = vld [vmem:[#allocation2 + $0xac] sm:$0xf]
    %v86 = vld [vmem:[#allocation2 + $0xb0] sm:$0xf]
    %v87 = vld [vmem:[#allocation2 + $0xb4] sm:$0xf]
    %v88 = vld [vmem:[#allocation2 + $0xb8] sm:$0xf]
    %v89 = vld [vmem:[#allocation2 + $0xbc] sm:$0xf]
    %v90 = vld [vmem:[#allocation2 + $0xc0] sm:$0xf]
    %v91 = vld [vmem:[#allocation2 + $0xc4] sm:$0xf]
    %v92 = vld [vmem:[#allocation2 + $0xc8] sm:$0xf]
    %v93 = vld [vmem:[#allocation2 + $0xcc] sm:$0xf]
    %v94 = vld [vmem:[#allocation2 + $0xd0] sm:$0xf]
    %v95 = vld [vmem:[#allocation2 + $0xd4] sm:$0xf]
    %v96 = vld [vmem:[#allocation2 + $0xd8] sm:$0xf]
    %v97 = vld [vmem:[#allocation2 + $0xdc] sm:$0xf]
    %v98 = vld [vmem:[#allocation2 + $0xe0] sm:$0xf]
    %v99 = vld [vmem:[#allocation2 + $0xe4] sm:$0xf]
    %v100 = vld [vmem:[#allocation2 + $0xe8] sm:$0xf]
    %v101 = vld [vmem:[#allocation2 + $0xec] sm:$0xf]
    %v102 = vld [vmem:[#allocation2 + $0xf0] sm:$0xf]
    %v103 = vld [vmem:[#allocation2 + $0xf4] sm:$0xf]
    %v104 = vld [vmem:[#allocation2 + $0xf8] sm:$0xf]
    %v105 = vld [vmem:[#allocation2 + $0xfc] sm:$0xf]
    %v110 = vunpack.c.l.b16 %v38
    %v111 = vunpack.c.h.b16 %v38
    %v112 = vunpack.c.l.b16 %v39
    %v113 = vunpack.c.h.b16 %v39
    %v114 = vunpack.c.l.b16 %v40
    %v115 = vunpack.c.h.b16 %v40
    %v116 = vunpack.c.l.b16 %v41
    %v117 = vunpack.c.h.b16 %v41
    %v118 = vpack.c.b16 %v114, %v110
    %v119 = vpack.c.b16 %v115, %v111
    %v120 = vpack.c.b16 %v116, %v112
    %v121 = vpack.c.b16 %v117, %v113
    %v190 = vunpack.c.l.b16 %v42
    %v191 = vunpack.c.l.b16 %v43
    %v192 = vunpack.c.l.b16 %v44
    %v193 = vunpack.c.l.b16 %v45
    %v194 = vunpack.c.l.b16 %v46
    %v195 = vunpack.c.l.b16 %v47
    %v196 = vunpack.c.l.b16 %v48
    %v197 = vunpack.c.l.b16 %v49
    %v198 = vunpack.c.l.b16 %v50
    %v199 = vunpack.c.l.b16 %v51
    %v200 = vunpack.c.l.b16 %v52
    %v201 = vunpack.c.l.b16 %v53
    %v202 = vunpack.c.l.b16 %v54
    %v203 = vunpack.c.l.b16 %v55
    %v204 = vunpack.c.l.b16 %v56
    %v205 = vunpack.c.l.b16 %v57
    %v206 = vunpack.c.l.b16 %v58
    %v207 = vunpack.c.l.b16 %v59
    %v208 = vunpack.c.l.b16 %v60
    %v209 = vunpack.c.l.b16 %v61
    %v210 = vunpack.c.l.b16 %v62
    %v211 = vunpack.c.l.b16 %v63
    %v212 = vunpack.c.l.b16 %v64
    %v213 = vunpack.c.l.b16 %v65
    %v214 = vunpack.c.l.b16 %v66
    %v215 = vunpack.c.l.b16 %v67
    %v216 = vunpack.c.l.b16 %v68
    %v217 = vunpack.c.l.b16 %v69
    %v218 = vunpack.c.l.b16 %v70
    %v219 = vunpack.c.l.b16 %v71
    %v220 = vunpack.c.l.b16 %v72
    %v221 = vunpack.c.l.b16 %v73
    %v222 = vunpack.c.l.b16 %v74
    %v223 = vunpack.c.l.b16 %v75
    %v224 = vunpack.c.l.b16 %v76
    %v225 = vunpack.c.l.b16 %v77
    %v226 = vunpack.c.l.b16 %v78
    %v227 = vunpack.c.l.b16 %v79
    %v228 = vunpack.c.l.b16 %v80
    %v229 = vunpack.c.l.b16 %v81
    %v230 = vunpack.c.l.b16 %v82
    %v231 = vunpack.c.l.b16 %v83
    %v232 = vunpack.c.l.b16 %v84
    %v233 = vunpack.c.l.b16 %v85
    %v234 = vunpack.c.l.b16 %v86
    %v235 = vunpack.c.l.b16 %v87
    %v236 = vunpack.c.l.b16 %v88
    %v237 = vunpack.c.l.b16 %v89
    %v238 = vunpack.c.l.b16 %v90
    %v239 = vunpack.c.l.b16 %v91
    %v240 = vunpack.c.l.b16 %v92
    %v241 = vunpack.c.l.b16 %v93
    %v242 = vunpack.c.l.b16 %v94
    %v243 = vunpack.c.l.b16 %v95
    %v244 = vunpack.c.l.b16 %v96
    %v245 = vunpack.c.l.b16 %v97
    %v246 = vunpack.c.l.b16 %v98
    %v247 = vunpack.c.l.b16 %v99
    %v248 = vunpack.c.l.b16 %v100
    %v249 = vunpack.c.l.b16 %v101
    %v250 = vunpack.c.l.b16 %v102
    %v251 = vunpack.c.l.b16 %v103
    %v252 = vunpack.c.l.b16 %v104
    %v253 = vunpack.c.l.b16 %v105
    %v254 = vpack.c.b16 %v191, %v190
    %v255 = vpack.c.b16 %v193, %v192
    %v256 = vpack.c.b16 %v195, %v194
    %v257 = vpack.c.b16 %v197, %v196
    %v258 = vpack.c.b16 %v199, %v198
    %v259 = vpack.c.b16 %v201, %v200
    %v260 = vpack.c.b16 %v203, %v202
    %v261 = vpack.c.b16 %v205, %v204
    %v262 = vpack.c.b16 %v207, %v206
    %v263 = vpack.c.b16 %v209, %v208
    %v264 = vpack.c.b16 %v211, %v210
    %v265 = vpack.c.b16 %v213, %v212
    %v266 = vpack.c.b16 %v215, %v214
    %v267 = vpack.c.b16 %v217, %v216
    %v268 = vpack.c.b16 %v219, %v218
    %v269 = vpack.c.b16 %v221, %v220
    %v270 = vpack.c.b16 %v223, %v222
    %v271 = vpack.c.b16 %v225, %v224
    %v272 = vpack.c.b16 %v227, %v226
    %v273 = vpack.c.b16 %v229, %v228
    %v274 = vpack.c.b16 %v231, %v230
    %v275 = vpack.c.b16 %v233, %v232
    %v276 = vpack.c.b16 %v235, %v234
    %v277 = vpack.c.b16 %v237, %v236
    %v278 = vpack.c.b16 %v239, %v238
    %v279 = vpack.c.b16 %v241, %v240
    %v280 = vpack.c.b16 %v243, %v242
    %v281 = vpack.c.b16 %v245, %v244
    %v282 = vpack.c.b16 %v247, %v246
    %v283 = vpack.c.b16 %v249, %v248
    %v284 = vpack.c.b16 %v251, %v250
    %v285 = vpack.c.b16 %v253, %v252
    %318 = vmatpush.bf16.msra.mxu0 %v261
    %319 = vmatpush.bf16.msra.mxu0 %v260
    %320 = vmatpush.bf16.msra.mxu0 %v259
    %321 = vmatpush.bf16.msra.mxu0 %v258
    %322 = vmatpush.bf16.msra.mxu0 %v257
    %323 = vmatpush.bf16.msra.mxu0 %v256
    %324 = vmatpush.bf16.msra.mxu0 %v255
    %325 = vmatpush.bf16.msra.mxu0 %v254
    %326 = vmatmul.bf16.gmra.mxu0 %v118
    %v327 = vpop.f32.mrf.mxu0
    %v328 = vadd.f32 0.0, %v327
    %v329 = vpop.f32.mrf.mxu0
    %v330 = vadd.f32 0.0, %v329
    %331 = vdwg.mxu0
    %332 = vmatpush.bf16.msra.mxu0 %v269
    %333 = vmatpush.bf16.msra.mxu0 %v268
    %334 = vmatpush.bf16.msra.mxu0 %v267
    %335 = vmatpush.bf16.msra.mxu0 %v266
    %336 = vmatpush.bf16.msra.mxu0 %v265
    %337 = vmatpush.bf16.msra.mxu0 %v264
    %338 = vmatpush.bf16.msra.mxu0 %v263
    %339 = vmatpush.bf16.msra.mxu0 %v262
    %340 = vmatmul.bf16.gmra.mxu0 %v119
    %v341 = vpop.f32.mrf.mxu0
    %v342 = vadd.f32 %v328, %v341
    %v343 = vpop.f32.mrf.mxu0
    %v344 = vadd.f32 %v330, %v343
    %345 = vdwg.mxu0
    %346 = vmatpush.bf16.msra.mxu0 %v277
    %347 = vmatpush.bf16.msra.mxu0 %v276
    %348 = vmatpush.bf16.msra.mxu0 %v275
    %349 = vmatpush.bf16.msra.mxu0 %v274
    %350 = vmatpush.bf16.msra.mxu0 %v273
    %351 = vmatpush.bf16.msra.mxu0 %v272
    %352 = vmatpush.bf16.msra.mxu0 %v271
    %353 = vmatpush.bf16.msra.mxu0 %v270
    %354 = vmatmul.bf16.gmra.mxu0 %v120
    %v355 = vpop.f32.mrf.mxu0
    %v356 = vadd.f32 %v342, %v355
    %v357 = vpop.f32.mrf.mxu0
    %v358 = vadd.f32 %v344, %v357
    %359 = vdwg.mxu0
    %360 = vmatpush.bf16.msra.mxu0 %v285
    %361 = vmatpush.bf16.msra.mxu0 %v284
    %362 = vmatpush.bf16.msra.mxu0 %v283
    %363 = vmatpush.bf16.msra.mxu0 %v282
    %364 = vmatpush.bf16.msra.mxu0 %v281
    %365 = vmatpush.bf16.msra.mxu0 %v280
    %366 = vmatpush.bf16.msra.mxu0 %v279
    %367 = vmatpush.bf16.msra.mxu0 %v278
    %368 = vmatmul.bf16.gmra.mxu0 %v121
    %v369 = vpop.f32.mrf.mxu0
    %v370 = vadd.f32 %v356, %v369
    %v371 = vpop.f32.mrf.mxu0
    %v372 = vadd.f32 %v358, %v371
    %373 = vdwg.mxu0
    %v374 = vadd.f32 %v36, %v370
    %v375 = vadd.f32 %v37, %v372
    %376 = vst [vmem:[%s3] sm:$0xff] %v374
    %377 = vst [vmem:[%s3 + $0x8] sm:$0xff] %v375
    // Predicated region
    $region22: #{_decaf_forward.2} parent=1 // pred_check
      %p378 = pneg %p30
    $region23: #{_decaf_forward.2} parent=1 // pred_check_branch
      %380 = sbr.rel (%p378) target = $region25
    $region24: #{_decaf_forward.2} parent=1 // pred_region
      %v381 = vld [vmem:[%s3] sm:$0xff]
      %v382 = vld [vmem:[%s3 + $0x8] sm:$0xff]
      %v383 = vpack.c.bf16 %v382, %v381
      %v384 = vld [vmem:[%s2] sm:$0xf]
      %v385 = vld [vmem:[%s2 + $0x4] sm:$0xf]
      %v386 = vld [vmem:[%s2 + $0x8] sm:$0xf]
      %v387 = vld [vmem:[%s2 + $0xc] sm:$0xf]
      %v388 = vld [vmem:[%s2 + $0x10] sm:$0xf]
      %v389 = vld [vmem:[%s2 + $0x14] sm:$0xf]
      %v390 = vld [vmem:[%s2 + $0x18] sm:$0xf]
      %v391 = vld [vmem:[%s2 + $0x1c] sm:$0xf]
      %v392 = vld [vmem:[%s2 + $0x20] sm:$0xf]
      %v393 = vld [vmem:[%s2 + $0x24] sm:$0xf]
      %v394 = vld [vmem:[%s2 + $0x28] sm:$0xf]
      %v395 = vld [vmem:[%s2 + $0x2c] sm:$0xf]
      %v396 = vld [vmem:[%s2 + $0x30] sm:$0xf]
      %v397 = vld [vmem:[%s2 + $0x34] sm:$0xf]
      %v398 = vld [vmem:[%s2 + $0x38] sm:$0xf]
      %v399 = vld [vmem:[%s2 + $0x3c] sm:$0xf]
      %v416 = vunpack.c.l.b16 %v384
      %v417 = vunpack.c.l.b16 %v385
      %v418 = vunpack.c.l.b16 %v386
      %v419 = vunpack.c.l.b16 %v387
      %v420 = vunpack.c.l.b16 %v388
      %v421 = vunpack.c.l.b16 %v389
      %v422 = vunpack.c.l.b16 %v390
      %v423 = vunpack.c.l.b16 %v391
      %v424 = vunpack.c.l.b16 %v392
      %v425 = vunpack.c.l.b16 %v393
      %v426 = vunpack.c.l.b16 %v394
      %v427 = vunpack.c.l.b16 %v395
      %v428 = vunpack.c.l.b16 %v396
      %v429 = vunpack.c.l.b16 %v397
      %v430 = vunpack.c.l.b16 %v398
      %v431 = vunpack.c.l.b16 %v399
      %v432 = vpack.c.b16 %v417, %v416
      %v433 = vpack.c.b16 %v419, %v418
      %v434 = vpack.c.b16 %v421, %v420
      %v435 = vpack.c.b16 %v423, %v422
      %v436 = vpack.c.b16 %v425, %v424
      %v437 = vpack.c.b16 %v427, %v426
      %v438 = vpack.c.b16 %v429, %v428
      %v439 = vpack.c.b16 %v431, %v430
      %448 = vmatpush.bf16.msra.mxu0 %v439
      %449 = vmatpush.bf16.msra.mxu0 %v438
      %450 = vmatpush.bf16.msra.mxu0 %v437
      %451 = vmatpush.bf16.msra.mxu0 %v436
      %452 = vmatpush.bf16.msra.mxu0 %v435
      %453 = vmatpush.bf16.msra.mxu0 %v434
      %454 = vmatpush.bf16.msra.mxu0 %v433
      %455 = vmatpush.bf16.msra.mxu0 %v432
      %456 = vmatmul.bf16.gmra.mxu0 %v383
      %v457 = vpop.f32.mrf.mxu0
      %v458 = vadd.f32 0.0, %v457
      %v459 = vpop.f32.mrf.mxu0
      %v460 = vadd.f32 0.0, %v459
      %461 = vdwg.mxu0
      %v462 = vmax.f32 %v458, 0.0
      %v463 = vmax.f32 %v460, 0.0
      %v464 = vadd.f32 %v381, %v462
      %v465 = vadd.f32 %v382, %v463
      %466 = vst [vmem:[%s3] sm:$0xff] %v464
      %467 = vst [vmem:[%s3 + $0x8] sm:$0xff] %v465
    $region25: #{_decaf_forward.2} parent=1 // pred_fallthru
      _
    // Predicated region
    $region26: #{_decaf_forward.2} parent=1 // pred_check
      _
    $region27: #{_decaf_forward.2} parent=1 // pred_check_branch
      %469 = sbr.rel (0) target = $region29
    $region28: #{_decaf_forward.2} parent=1 // pred_region
      _
    $region29: #{_decaf_forward.2} parent=1 // pred_fallthru
      _
    // Predicated region
    $region30: #{_decaf_forward.2} parent=1 // pred_check
      _
    $region31: #{_decaf_forward.2} parent=1 // pred_check_branch
      %471 = sbr.rel (0) target = $region33
    $region32: #{_decaf_forward.2} parent=1 // pred_region
      _
    $region33: #{_decaf_forward.2} parent=1 // pred_fallthru
      _
    %472 = vsyncpa [#allocation3], 1

</llo_original>
